<compile_context>
chip_gen: v7x
topology: tpu7x:2x2x1
jax: 0.10.0
libtpu: 0.0.40
codegen_flags: <defaults>
</compile_context>

<pallas_src>
import jax
import jax.numpy as jnp
from jax.experimental import pallas as pl
from jax.experimental.pallas import tpu as pltpu


def _relu_kernel(x_ref, o_ref):
    # Elementwise ReLU on the whole VMEM tile (VPU op).
    o_ref[...] = jnp.maximum(x_ref[...], 0)


def _sublane_multiple(dtype) -> int:
    # 8 sublanes for 32-bit dtypes, 16 for 16-bit, 32 for 8-bit (packing).
    itemsize = jnp.dtype(dtype).itemsize
    return max(8, 32 // max(itemsize, 1))


def relu_pallas(x: jax.Array) -> jax.Array:
    """ReLU implemented as a Pallas TPU kernel (any shape / size)."""
    orig_shape = x.shape
    dtype = x.dtype
    n_total = x.size
    if n_total == 0:
        return x

    itemsize = jnp.dtype(dtype).itemsize
    sub = _sublane_multiple(dtype)
    flat = jnp.ravel(x)

    # ------------------------------------------------------------------
    # Small path: one whole-array block in VMEM, no grid (zero grid-step
    # overhead). Used for anything up to 2 MiB.
    # ------------------------------------------------------------------
    small_bytes = 2 * 1024 * 1024
    if n_total * itemsize <= small_bytes:
        lanes = 128
        tile = sub * lanes
        pad_to = -(-n_total // tile) * tile
        if pad_to != n_total:
            flat = jnp.pad(flat, (0, pad_to - n_total))
        slab = flat.reshape(pad_to // lanes, lanes)

        out_slab = pl.pallas_call(
            _relu_kernel,
            out_shape=jax.ShapeDtypeStruct(slab.shape, dtype),
            in_specs=[pl.BlockSpec(memory_space=pltpu.MemorySpace.VMEM)],
            out_specs=pl.BlockSpec(memory_space=pltpu.MemorySpace.VMEM),
        )(slab)

        out_flat = out_slab.reshape(-1)
        if pad_to != n_total:
            out_flat = out_flat[:n_total]
        return out_flat.reshape(orig_shape)

    # ------------------------------------------------------------------
    # Large path: wide lane-dense slab, ~1 MiB blocks, parallel 1-D grid.
    # ------------------------------------------------------------------
    lanes = 512                                   # wide multiple of 128
    target_block_bytes = 1 << 20                  # ~1 MiB per block
    block_rows = max(sub, target_block_bytes // (lanes * itemsize))
    block_rows = -(-block_rows // sub) * sub      # round up to sublane multiple
    tile = block_rows * lanes

    pad_to = -(-n_total // tile) * tile
    if pad_to // tile < 2:                        # keep >=2 steps (v7x megacore)
        pad_to = 2 * tile
    if pad_to != n_total:
        flat = jnp.pad(flat, (0, pad_to - n_total))

    rows = pad_to // lanes
    slab = flat.reshape(rows, lanes)
    grid = (rows // block_rows,)

    out_slab = pl.pallas_call(
        _relu_kernel,
        out_shape=jax.ShapeDtypeStruct((rows, lanes), dtype),
        grid=grid,
        in_specs=[pl.BlockSpec((block_rows, lanes), lambda i: (i, 0))],
        out_specs=pl.BlockSpec((block_rows, lanes), lambda i: (i, 0)),
        compiler_params=pltpu.CompilerParams(
            dimension_semantics=("parallel",),
            vmem_limit_bytes=32 * 1024 * 1024,
        ),
    )(slab)

    out_flat = out_slab.reshape(-1)[:n_total]
    return out_flat.reshape(orig_shape)


if __name__ == "__main__":
    key = jax.random.PRNGKey(0)

    # NCHW input matching the PyTorch module's expected small shapes:
    # batch=2, channels=4, spatial=16x16, f32.
    x = jax.random.normal(key, (2, 4, 16, 16), dtype=jnp.float32)
    y = relu_pallas(x)
    jax.block_until_ready(y)

    y_ref = jnp.maximum(x, 0.0)
    assert y.shape == x.shape and y.dtype == x.dtype
    assert jnp.allclose(y, y_ref), "Pallas ReLU mismatch vs reference (small path)"

    # Also exercise the tiled large-tensor path once (awkward, non-aligned size).
    x_big = jax.random.normal(jax.random.PRNGKey(1), (3, 700, 501), dtype=jnp.float32)
    y_big = relu_pallas(x_big)
    jax.block_until_ready(y_big)
    assert jnp.allclose(y_big, jnp.maximum(x_big, 0.0)), (
        "Pallas ReLU mismatch vs reference (large path)"
    )

    print("KERNEL_OK")
</pallas_src>

<mosaic_0001>
module attributes {stable_mosaic.version = 11 : i64} {
  func.func @_relu_kernel(%arg0: memref<16x128xf32, #tpu.memory_space<vmem>>, %arg1: memref<16x128xf32, #tpu.memory_space<vmem>>) attributes {dimension_semantics = [], scalar_prefetch = 0 : i64, scratch_operands = 0 : i64, tpu.core_type = #tpu.core_type<tc>} {
    %c0 = arith.constant 0 : index
    %c0_0 = arith.constant 0 : index
    %0 = vector.load %arg0[%c0, %c0_0] : memref<16x128xf32, #tpu.memory_space<vmem>>, vector<16x128xf32>
    %cst = arith.constant 0.000000e+00 : f32
    %1 = vector.broadcast %cst : f32 to vector<16x128xf32>
    %2 = arith.maximumf %0, %1 : vector<16x128xf32>
    %c0_1 = arith.constant 0 : index
    %c0_2 = arith.constant 0 : index
    %3 = vector.load %arg1[%c0_1, %c0_2] : memref<16x128xf32, #tpu.memory_space<vmem>>, vector<16x128xf32>
    tpu.vector_store %arg1[%c0_1, %c0_2], %2 {strides = array<i32>} : memref<16x128xf32, #tpu.memory_space<vmem>>, vector<16x128xf32>,
    return
  }
}

</mosaic_0001>

<llo_original>
// kernel: tpu_custom_call.1
$region0: #{tpu_custom_call.1}
  #allocation0 [shape = 'u32[]', space=smem, size = 0x4, offset = 0x4, fixed_abs, tag = 'smem constant byte address 0x4 - core index']
  #allocation1 [shape = 'u32[144,128]{1,0:T(1,128)}', space=vmem, size = 0x12000, scoped, tag = 'internal scratch']
  %s0 = inlined_call_operand.hbm [shape: f32[16,128], index: 0, kind: input, shape index: {}]
  %s1 = inlined_call_operand.hbm [shape: f32[16,128], index: 1, kind: output, shape index: {}]
  %s2 = sld [smem:[#allocation0]]
  $region18: #{tpu_custom_call.1} parent=0
    _
  %s4 = ssub.s32 1, %s2
  %s5 = scalar_select 0, %s4, %s2
  $region1: #{tpu_custom_call.1} parent=0
    #allocation2 [shape = 'u8[8192]{0}', space=vmem, size = 0x2000, scoped, tag = 'input window, operand 0, single buffered']
    #allocation3 [shape = 's32[1]{0}', space=sflag, size = 0x4, scoped, tag = 'scoped memory for tpu_custom_call.1']
    #allocation4 [shape = 's32[1]{0}', space=sflag, size = 0x4, scoped, tag = 'scoped memory for tpu_custom_call.1']
    #allocation5 [shape = 'u8[8192]{0}', space=vmem, size = 0x2000, scoped, tag = 'output window, operand 0, single buffered']
    %6 = vsyncpa [#allocation3], 0
    %7 = vsyncpa [#allocation4], 0
    // Predicated region
    $region2: #{tpu_custom_call.1} parent=1 // pred_check
      _
    $region3: #{tpu_custom_call.1} parent=1 // pred_check_branch
      %9 = sbr.rel (0) target = $region5
    $region4: #{tpu_custom_call.1} parent=1 // pred_region
      %s11 = ssub.s32 256, 256
      %12 = vsyncadd [#allocation3], %s11
      %s13 = sshll.u32 [#allocation2], 4
      %s14 = int_to_ptr.vmem [resolvable:$true] %s13
      %19 = dma.hbm_to_vmem [thread:$0]  %s0, 256, %s14, [#allocation3], 128, 128, 8
    $region5: #{tpu_custom_call.1} parent=1 // pred_fallthru
      _
    // Predicated region
    $region6: #{tpu_custom_call.1} parent=1 // pred_check
      _
    $region7: #{tpu_custom_call.1} parent=1 // pred_check_branch
      %21 = sbr.rel (0) target = $region9
    $region8: #{tpu_custom_call.1} parent=1 // pred_region
      %22 = dma.done [#allocation3], 256
    $region9: #{tpu_custom_call.1} parent=1 // pred_fallthru
      _
    %v23 = vld [vmem:[#allocation2] sm:$0xff]
    %v24 = vld [vmem:[#allocation2 + $0x8] sm:$0xff]
    %v25 = vmax.f32 %v23, 0.0
    %v26 = vmax.f32 %v24, 0.0
    %27 = vst [vmem:[#allocation5] sm:$0xff] %v25
    %28 = vst [vmem:[#allocation5 + $0x8] sm:$0xff] %v26
    // Predicated region
    $region10: #{tpu_custom_call.1} parent=1 // pred_check
      _
    $region11: #{tpu_custom_call.1} parent=1 // pred_check_branch
      %30 = sbr.rel (0) target = $region13
    $region12: #{tpu_custom_call.1} parent=1 // pred_region
      %s32 = ssub.s32 256, 256
      %33 = vsyncadd [#allocation4], %s32
      %s34 = sshll.u32 [#allocation5], 4
      %s35 = int_to_ptr.vmem [resolvable:$true] %s34
      %40 = dma.vmem_to_hbm [thread:$0]  %s35, 256, %s1, [#allocation4], 128, 128, 8
    $region13: #{tpu_custom_call.1} parent=1 // pred_fallthru
      _
    // Predicated region
    $region14: #{tpu_custom_call.1} parent=1 // pred_check
      _
    $region15: #{tpu_custom_call.1} parent=1 // pred_check_branch
      %42 = sbr.rel (0) target = $region17
    $region16: #{tpu_custom_call.1} parent=1 // pred_region
      %43 = dma.done [#allocation4], 256
    $region17: #{tpu_custom_call.1} parent=1 // pred_fallthru
      _
    %44 = vsyncpa [#allocation3], 1
    %45 = vsyncpa [#allocation4], 1

</llo_original>
